<compile_context>
chip_gen: v5e
topology: v5e:2x2
jax: 0.10.0
libtpu: 0.0.40
codegen_flags: <defaults>
</compile_context>

<pallas_src>
import functools

import jax
import jax.numpy as jnp
from jax import lax
from jax.experimental import pallas as pl
from jax.experimental.pallas import tpu as pltpu


# ------------------------------- helpers ----------------------------------- #

def _round_up(x, m):
    return ((x + m - 1) // m) * m


def _vmem_capacity_bytes():
    try:
        return int(pltpu.get_tpu_info().vmem_capacity_bytes)
    except Exception:
        return 64 << 20          # conservative fallback (v7x per-TensorCore)


def _default_tm():
    # 512-row tiles amortize the ~0.35us/step overhead on 128-MiB parts
    # (v5e/v6e); keep 256 on v7x so double-buffered activations plus resident
    # weights stay inside 64 MiB.
    return 512 if _vmem_capacity_bytes() >= (96 << 20) else 256


def _choose_tm(n, tm_req):
    # Row tile: multiple of 8 (sublane), no larger than the 8-rounded row
    # count, and small enough that the grid has >=2 steps when possible so
    # dimension_semantics=("parallel",) can shard across v7x's two TCs.
    tm = min(tm_req, _round_up(max(n, 1), 8))
    tm = max(_round_up(tm, 8), 8)
    if n > 8 and pl.cdiv(n, tm) < 2:
        tm = max(_round_up(pl.cdiv(n, 2), 8), 8)
    return tm


def _vmem_limit_bytes(resident_bytes, per_step_stream_bytes):
    cap = _vmem_capacity_bytes()
    # resident operands single-buffered + double-buffered streamed blocks
    # + headroom for internal scratch / intermediates.
    need = resident_bytes + 2 * per_step_stream_bytes + (8 << 20)
    return int(max(32 << 20, min(need, cap - (8 << 20))))


def _gelu(x):
    # tanh-approx GELU (jax.nn.gelu default).  PyTorch nn.GELU default is erf.
    return jax.nn.gelu(x)


# ----------------------------- Pallas kernels ------------------------------ #

def _masked_linear_gelu_kernel(x_ref, w_ref, b_ref, m_ref, o_ref):
    # x: (tm, d_in)  w: (d_in, d_out)  b: (1, d_out)  m: (tm, 1)  o: (tm, d_out)
    y = jnp.dot(x_ref[...].astype(w_ref.dtype), w_ref[...],
                preferred_element_type=jnp.float32)
    y = _gelu(y + b_ref[...].astype(jnp.float32))
    o_ref[...] = (y * m_ref[...].astype(jnp.float32)).astype(o_ref.dtype)


def _fused_masked_mlp_kernel(x_ref, w_ref, b_ref, m_ref, o_ref, *,
                             num_layers, unroll):
    # x: (tm, d)  w: (L, d, d)  b: (L, 1, d)  m: (tm, 1)  o: (tm, d)
    # Mask broadcast hoisted out of the layer loop (broadcast_in_dim is never
    # CSE'd by JAX) — one broadcast total instead of L.
    m_b = jnp.broadcast_to(m_ref[...].astype(jnp.float32), o_ref.shape)
    h = x_ref[...].astype(jnp.float32)

    def layer(l, h):
        y = jnp.dot(h.astype(w_ref.dtype), w_ref[l],
                    preferred_element_type=jnp.float32)
        y = _gelu(y + b_ref[l].astype(jnp.float32))
        return y * m_b

    if unroll:                              # small L: fully unrolled
        for l in range(num_layers):
            h = layer(l, h)
    else:                                   # deep stacks: bounded live ranges
        h = lax.fori_loop(0, num_layers, layer, h)
    o_ref[...] = h.astype(o_ref.dtype)


# ------------------------------ sub-module ---------------------------------- #

class MaskedLinearGelu:
    """One element of the MaskedSequential container.

    forward(x, mask=None): y = gelu(x @ W + b); masked rows are zeroed when a
    mask is given.  Weights are stored at their natural shape (no feature
    padding), so activations need no wrapper-side pad/slice copies.  Pass bf16
    w/b for bf16 MXU compute on v6e/v7x (accumulation and epilogue stay f32).
    """

    def __init__(self, w, b, tm=None):
        self.d_in, self.d_out = w.shape
        self.w = jnp.asarray(w)
        self.b = jnp.asarray(b).reshape(1, self.d_out)
        self.tm = _default_tm() if tm is None else tm

    def __call__(self, x, mask=None):
        n, d = x.shape
        assert d == self.d_in
        tm = _choose_tm(n, self.tm)
        if mask is None:
            m = jnp.ones((n, 1), jnp.float32)
        else:
            m = mask.reshape(n, 1).astype(jnp.float32)

        w_item = jnp.dtype(self.w.dtype).itemsize
        resident = (self.d_in * self.d_out + self.d_out) * w_item
        stream = tm * (self.d_in * x.dtype.itemsize
                       + self.d_out * x.dtype.itemsize + 128 * 4)

        return pl.pallas_call(
            _masked_linear_gelu_kernel,
            out_shape=jax.ShapeDtypeStruct((n, self.d_out), x.dtype),
            grid=(pl.cdiv(n, tm),),            # partial tail block handled by Pallas
            in_specs=[
                pl.BlockSpec((tm, self.d_in), lambda i: (i, 0)),
                # resident operands (constant index_map) -> single-buffered
                pl.BlockSpec((self.d_in, self.d_out), lambda i: (0, 0),
                             pipeline_mode=pl.Buffered(1)),
                pl.BlockSpec((1, self.d_out), lambda i: (0, 0),
                             pipeline_mode=pl.Buffered(1)),
                pl.BlockSpec((tm, 1), lambda i: (i, 0)),
            ],
            out_specs=pl.BlockSpec((tm, self.d_out), lambda i: (i, 0)),
            compiler_params=pltpu.CompilerParams(
                dimension_semantics=("parallel",),
                vmem_limit_bytes=_vmem_limit_bytes(resident, stream)),
        )(x, self.w, self.b, m)


# --------------------------- MaskedSequential ------------------------------- #

class MaskedSequential:
    """Faithful translation of the PyTorch container's forward(), with a fused
    single-pallas_call fast path (all weights resident in VMEM, intermediate
    activations never leave VMEM) when every sub-module is a MaskedLinearGelu
    of uniform width and the resident footprint fits the per-core VMEM budget."""

    def __init__(self, args, tm=None):
        self.modules_list = list(args)
        self._tm = _default_tm() if tm is None else tm
        self._fused = self._try_build_fused()

    # ---- fusion setup (generation-aware VMEM gate) ---- #
    def _try_build_fused(self):
        mods = self.modules_list
        if not mods or not all(isinstance(m, MaskedLinearGelu) for m in mods):
            return None
        d = mods[0].d_in
        for m in mods:
            if m.d_in != d or m.d_out != d:
                return None
        w_stack = jnp.stack([m.w for m in mods])     # (L, d, d)
        b_stack = jnp.stack([m.b for m in mods])     # (L, 1, d)
        resident_bytes = int(w_stack.size * jnp.dtype(w_stack.dtype).itemsize
                             + b_stack.size * jnp.dtype(b_stack.dtype).itemsize)
        # Weights are single-buffered; leave ~24 MiB for activations/scratch.
        budget = max(_vmem_capacity_bytes() - (24 << 20), 8 << 20)
        if resident_bytes > budget:
            # TODO(synk): K/N-tile the weight stack with an "arbitrary"
            # reduction grid axis + pl.when-zeroed accumulator instead of
            # falling back to per-module calls.
            return None
        return (w_stack, b_stack, d, resident_bytes)

    # ---- fused fast path: one kernel, no HBM round-trip between layers ---- #
    def _call_fused(self, x, mask):
        w_stack, b_stack, d, resident_bytes = self._fused
        n, din = x.shape
        assert din == d
        num_layers = w_stack.shape[0]
        tm = _choose_tm(n, self._tm)
        if mask is None:
            m = jnp.ones((n, 1), jnp.float32)
        else:
            m = mask.reshape(n, 1).astype(jnp.float32)

        stream = tm * (2 * d * x.dtype.itemsize + 128 * 4)
        kernel = functools.partial(_fused_masked_mlp_kernel,
                                   num_layers=num_layers,
                                   unroll=num_layers <= 4)

        return pl.pallas_call(
            kernel,
            out_shape=jax.ShapeDtypeStruct((n, d), x.dtype),
            grid=(pl.cdiv(n, tm),),
            in_specs=[
                pl.BlockSpec((tm, d), lambda i: (i, 0)),
                # resident weight / bias stacks: single-buffered
                pl.BlockSpec(w_stack.shape, lambda i: (0, 0, 0),
                             pipeline_mode=pl.Buffered(1)),
                pl.BlockSpec(b_stack.shape, lambda i: (0, 0, 0),
                             pipeline_mode=pl.Buffered(1)),
                pl.BlockSpec((tm, 1), lambda i: (i, 0)),
            ],
            out_specs=pl.BlockSpec((tm, d), lambda i: (i, 0)),
            compiler_params=pltpu.CompilerParams(
                dimension_semantics=("parallel",),
                vmem_limit_bytes=_vmem_limit_bytes(resident_bytes, stream)),
        )(x, w_stack, b_stack, m)

    # ---- forward() ---- #
    def __call__(self, input, mask=None):
        if self._fused is not None:
            return self._call_fused(input, mask)
        # generic fallback: faithful per-module chaining (mask threading)
        # TODO(synk): row compaction by mask (PrefetchScalarGridSpec + row
        # gather) would skip the FLOPs spent on rows the mask zeroes anyway.
        for module in self.modules_list:
            input = module(input, mask) if mask is not None else module(input)
        return input


# --------------------------------- main ------------------------------------- #

if __name__ == "__main__":
    B, S, D = 2, 8, 32          # batch, seq, hidden
    key = jax.random.PRNGKey(0)
    kx, kw1, kb1, kw2, kb2, km = jax.random.split(key, 6)

    x = jax.random.normal(kx, (B, S, D), dtype=jnp.float32)
    w1 = jax.random.normal(kw1, (D, D), dtype=jnp.float32) * 0.05
    b1 = jax.random.normal(kb1, (D,), dtype=jnp.float32) * 0.01
    w2 = jax.random.normal(kw2, (D, D), dtype=jnp.float32) * 0.05
    b2 = jax.random.normal(kb2, (D,), dtype=jnp.float32) * 0.01

    # token mask: 1.0 keep / 0.0 masked, shape (B, S)
    mask_bs = (jax.random.uniform(km, (B, S)) > 0.3).astype(jnp.float32)

    model = MaskedSequential([
        MaskedLinearGelu(w1, b1),
        MaskedLinearGelu(w2, b2),
    ])

    # flatten (B, S, D) -> (N, D); mask -> (N, 1)
    x2d = x.reshape(B * S, D)
    mask2d = mask_bs.reshape(B * S, 1)

    # fused path with mask / without mask, standalone module kernel,
    # and an odd row count to exercise the partial-tail-block path.
    out_masked = jax.block_until_ready(model(x2d, mask2d)).reshape(B, S, D)
    out_plain = jax.block_until_ready(model(x2d)).reshape(B, S, D)
    out_single = jax.block_until_ready(model.modules_list[0](x2d, mask2d))
    n_odd = 13
    out_odd = jax.block_until_ready(model(x2d[:n_odd], mask2d[:n_odd]))

    # pure-JAX reference (same tanh-approx GELU as the kernel)
    def ref_layer(xx, w, b, m):
        y = jax.nn.gelu(xx @ w + b)
        return y * m if m is not None else y

    ref_m = ref_layer(ref_layer(x2d, w1, b1, mask2d), w2, b2, mask2d).reshape(B, S, D)
    ref_p = ref_layer(ref_layer(x2d, w1, b1, None), w2, b2, None).reshape(B, S, D)
    ref_s = ref_layer(x2d, w1, b1, mask2d)
    ref_o = ref_layer(ref_layer(x2d[:n_odd], w1, b1, mask2d[:n_odd]),
                      w2, b2, mask2d[:n_odd])

    assert jnp.allclose(out_masked, ref_m, atol=1e-5, rtol=1e-5)
    assert jnp.allclose(out_plain, ref_p, atol=1e-5, rtol=1e-5)
    assert jnp.allclose(out_single, ref_s, atol=1e-5, rtol=1e-5)
    assert jnp.allclose(out_odd, ref_o, atol=1e-5, rtol=1e-5)

    print("KERNEL_OK")
</pallas_src>

<mosaic_0001>
module attributes {stable_mosaic.version = 11 : i64} {
  func.func @_fused_masked_mlp_kernel(%arg0: i32, %arg1: memref<8x32xf32, #tpu.memory_space<vmem>>, %arg2: memref<2x32x32xf32, #tpu.memory_space<vmem>>, %arg3: memref<2x1x32xf32, #tpu.memory_space<vmem>>, %arg4: memref<8x1xf32, #tpu.memory_space<vmem>>, %arg5: memref<8x32xf32, #tpu.memory_space<vmem>>) attributes {dimension_semantics = [#tpu.dimension_semantics<parallel>], iteration_bounds = array<i64: 2>, scalar_prefetch = 0 : i64, scratch_operands = 0 : i64, tpu.core_type = #tpu.core_type<tc>, window_params = [{transform_indices = @transform_0, window_bounds = array<i64: 8, 32>}, {pipeline_mode = #tpu.pipeline_mode<synchronous>, transform_indices = @transform_1, window_bounds = array<i64: 2, 32, 32>}, {pipeline_mode = #tpu.pipeline_mode<synchronous>, transform_indices = @transform_2, window_bounds = array<i64: 2, 1, 32>}, {transform_indices = @transform_3, window_bounds = array<i64: 8, 1>}, {transform_indices = @transform_4, window_bounds = array<i64: 8, 32>}]} {
    %c0 = arith.constant 0 : index
    %c0_0 = arith.constant 0 : index
    %0 = vector.load %arg4[%c0, %c0_0] : memref<8x1xf32, #tpu.memory_space<vmem>>, vector<8x1xf32>
    %1 = vector.shape_cast %0 : vector<8x1xf32> to vector<8x1xf32>
    %2 = vector.broadcast %1 : vector<8x1xf32> to vector<8x32xf32>
    %c0_1 = arith.constant 0 : index
    %c0_2 = arith.constant 0 : index
    %3 = vector.load %arg1[%c0_1, %c0_2] : memref<8x32xf32, #tpu.memory_space<vmem>>, vector<8x32xf32>
    %c0_3 = arith.constant 0 : index
    %c0_4 = arith.constant 0 : index
    %c0_5 = arith.constant 0 : index
    %4 = vector.load %arg2[%c0_3, %c0_4, %c0_5] : memref<2x32x32xf32, #tpu.memory_space<vmem>>, vector<1x32x32xf32>
    %5 = vector.shape_cast %4 : vector<1x32x32xf32> to vector<32x32xf32>
    %cst = arith.constant dense<0.000000e+00> : vector<8x32xf32>
    %6 = tpu.matmul %3, %5, %cst {dimension_numbers = #tpu.dot_dimension_numbers<[1], [0], [0], [1], [0, 0, 1, 1], [], []>} : vector<8x32xf32>, vector<32x32xf32>, vector<8x32xf32> -> vector<8x32xf32>
    %c0_6 = arith.constant 0 : index
    %c0_7 = arith.constant 0 : index
    %c0_8 = arith.constant 0 : index
    %7 = vector.load %arg3[%c0_6, %c0_7, %c0_8] : memref<2x1x32xf32, #tpu.memory_space<vmem>>, vector<1x1x32xf32>
    %8 = vector.shape_cast %7 : vector<1x1x32xf32> to vector<1x32xf32>
    %9 = vector.broadcast %8 : vector<1x32xf32> to vector<8x32xf32>
    %10 = arith.addf %6, %9 : vector<8x32xf32>
    %11 = arith.mulf %10, %10 : vector<8x32xf32>
    %12 = arith.mulf %10, %11 : vector<8x32xf32>
    %cst_9 = arith.constant 4.471500e-02 : f32
    %13 = vector.broadcast %cst_9 : f32 to vector<8x32xf32>
    %14 = arith.mulf %13, %12 : vector<8x32xf32>
    %15 = arith.addf %10, %14 : vector<8x32xf32>
    %cst_10 = arith.constant 0.797884583 : f32
    %16 = vector.broadcast %cst_10 : f32 to vector<8x32xf32>
    %17 = arith.mulf %16, %15 : vector<8x32xf32>
    %18 = math.tanh %17 : vector<8x32xf32>
    %cst_11 = arith.constant 1.000000e+00 : f32
    %19 = vector.broadcast %cst_11 : f32 to vector<8x32xf32>
    %20 = arith.addf %19, %18 : vector<8x32xf32>
    %cst_12 = arith.constant 5.000000e-01 : f32
    %21 = vector.broadcast %cst_12 : f32 to vector<8x32xf32>
    %22 = arith.mulf %21, %20 : vector<8x32xf32>
    %23 = arith.mulf %10, %22 : vector<8x32xf32>
    %24 = arith.mulf %23, %2 : vector<8x32xf32>
    %c1 = arith.constant 1 : index
    %c0_13 = arith.constant 0 : index
    %c0_14 = arith.constant 0 : index
    %25 = vector.load %arg2[%c1, %c0_13, %c0_14] : memref<2x32x32xf32, #tpu.memory_space<vmem>>, vector<1x32x32xf32>
    %26 = vector.shape_cast %25 : vector<1x32x32xf32> to vector<32x32xf32>
    %cst_15 = arith.constant dense<0.000000e+00> : vector<8x32xf32>
    %27 = tpu.matmul %24, %26, %cst_15 {dimension_numbers = #tpu.dot_dimension_numbers<[1], [0], [0], [1], [0, 0, 1, 1], [], []>} : vector<8x32xf32>, vector<32x32xf32>, vector<8x32xf32> -> vector<8x32xf32>
    %c1_16 = arith.constant 1 : index
    %c0_17 = arith.constant 0 : index
    %c0_18 = arith.constant 0 : index
    %28 = vector.load %arg3[%c1_16, %c0_17, %c0_18] : memref<2x1x32xf32, #tpu.memory_space<vmem>>, vector<1x1x32xf32>
    %29 = vector.shape_cast %28 : vector<1x1x32xf32> to vector<1x32xf32>
    %30 = vector.broadcast %29 : vector<1x32xf32> to vector<8x32xf32>
    %31 = arith.addf %27, %30 : vector<8x32xf32>
    %32 = arith.mulf %31, %31 : vector<8x32xf32>
    %33 = arith.mulf %31, %32 : vector<8x32xf32>
    %cst_19 = arith.constant 4.471500e-02 : f32
    %34 = vector.broadcast %cst_19 : f32 to vector<8x32xf32>
    %35 = arith.mulf %34, %33 : vector<8x32xf32>
    %36 = arith.addf %31, %35 : vector<8x32xf32>
    %cst_20 = arith.constant 0.797884583 : f32
    %37 = vector.broadcast %cst_20 : f32 to vector<8x32xf32>
    %38 = arith.mulf %37, %36 : vector<8x32xf32>
    %39 = math.tanh %38 : vector<8x32xf32>
    %cst_21 = arith.constant 1.000000e+00 : f32
    %40 = vector.broadcast %cst_21 : f32 to vector<8x32xf32>
    %41 = arith.addf %40, %39 : vector<8x32xf32>
    %cst_22 = arith.constant 5.000000e-01 : f32
    %42 = vector.broadcast %cst_22 : f32 to vector<8x32xf32>
    %43 = arith.mulf %42, %41 : vector<8x32xf32>
    %44 = arith.mulf %31, %43 : vector<8x32xf32>
    %45 = arith.mulf %44, %2 : vector<8x32xf32>
    %c0_23 = arith.constant 0 : index
    %c0_24 = arith.constant 0 : index
    %46 = vector.load %arg5[%c0_23, %c0_24] : memref<8x32xf32, #tpu.memory_space<vmem>>, vector<8x32xf32>
    tpu.vector_store %arg5[%c0_23, %c0_24], %45 {strides = array<i32>} : memref<8x32xf32, #tpu.memory_space<vmem>>, vector<8x32xf32>,
    return
  }
  func.func @transform_0(%arg0: i32) -> (i32, i32) {
    %c0_i32 = arith.constant 0 : i32
    %c0_i32_0 = arith.constant 0 : i32
    return %arg0, %c0_i32 : i32, i32
  }
  func.func @transform_1(%arg0: i32) -> (i32, i32, i32) {
    %c0_i32 = arith.constant 0 : i32
    %c0_i32_0 = arith.constant 0 : i32
    %c0_i32_1 = arith.constant 0 : i32
    %c0_i32_2 = arith.constant 0 : i32
    return %c0_i32, %c0_i32_0, %c0_i32_1 : i32, i32, i32
  }
  func.func @transform_2(%arg0: i32) -> (i32, i32, i32) {
    %c0_i32 = arith.constant 0 : i32
    %c0_i32_0 = arith.constant 0 : i32
    %c0_i32_1 = arith.constant 0 : i32
    %c0_i32_2 = arith.constant 0 : i32
    return %c0_i32, %c0_i32_0, %c0_i32_1 : i32, i32, i32
  }
  func.func @transform_3(%arg0: i32) -> (i32, i32) {
    %c0_i32 = arith.constant 0 : i32
    %c0_i32_0 = arith.constant 0 : i32
    return %arg0, %c0_i32 : i32, i32
  }
  func.func @transform_4(%arg0: i32) -> (i32, i32) {
    %c0_i32 = arith.constant 0 : i32
    %c0_i32_0 = arith.constant 0 : i32
    return %arg0, %c0_i32 : i32, i32
  }
}

</mosaic_0001>

<llo_original>
// kernel: tpu_custom_call.1
$region0: #{tpu_custom_call.1}
  #allocation0 [shape = 'u32[]', space=smem, size = 0x4, offset = 0x4, fixed_abs, tag = 'smem constant byte address 0x4 - core index']
  #allocation1 [shape = 'u32[72,128]{1,0:T(1,128)}', space=vmem, size = 0x9000, scoped, tag = 'internal scratch']
  %s0 = inlined_call_operand.vmem [shape: f32[16,32], index: 0, kind: input, shape index: {}]
  %s1 = inlined_call_operand.hbm [shape: f32[2,32,32], index: 1, kind: input, shape index: {}]
  %s2 = inlined_call_operand.hbm [shape: f32[2,1,32], index: 2, kind: input, shape index: {}]
  %s3 = inlined_call_operand.vmem [shape: f32[16,1], index: 3, kind: input, shape index: {}]
  %s4 = inlined_call_operand.hbm [shape: f32[16,32], index: 4, kind: output, shape index: {}]
  %s5 = sld [smem:[#allocation0]]
  $region57: #{tpu_custom_call.1} parent=0
    _
  %s7 = ssub.s32 1, %s5
  %s8 = scalar_select 0, %s7, %s5
  $region1: #{tpu_custom_call.1} parent=0
    #allocation2 [shape = 'u8[32768]{0}', space=vmem, size = 0x8000, scoped, tag = 'input window, operand 1, single buffered']
    #allocation3 [shape = 's32[2]{0}', space=sflag, size = 0x8, scoped, tag = 'scoped memory for tpu_custom_call.1']
    #allocation4 [shape = 's32[2]{0}', space=sflag, size = 0x8, scoped, tag = 'scoped memory for tpu_custom_call.1']
    #allocation5 [shape = 'u8[1024]{0}', space=vmem, size = 0x400, scoped, tag = 'input window, operand 2, single buffered']
    #allocation6 [shape = 's32[1]{0}', space=sflag, size = 0x4, scoped, tag = 'scoped memory for tpu_custom_call.1']
    #allocation7 [shape = 'u8[8192]{0}', space=vmem, size = 0x2000, scoped, tag = 'output window, operand 0']
    %9 = vsyncpa [#allocation3], 0
    %10 = vsyncpa [#allocation6], 0
    %11 = vsyncpa [#allocation4], 0
    %s12 = scalar_lea.sflag [#allocation4], 1
    %13 = vsyncpa %s12, 0
    loop: start=0, step=1, limit=4
    $region2: #{tpu_custom_call.1} parent=1 // loop_pre_header
      _
    $region3: #{tpu_custom_call.1} parent=1 // loop_header
      %s15 = sphi 0, %s19
      %p16 = scmp.ge.s32.totalorder %s15, 4
      %s25 = sphi 0, %s27
      %s28 = sphi 0, %s25
      %s29 = sphi 0, %s28
      %s45 = sphi 0, %s29
      %s49 = sphi 0, %s49
      %s51 = sphi 0, %s49
      %s52 = sphi 0, %s51
      %s66 = sphi 0, %s52
      %s70 = sphi 0, %s70
      %s72 = sphi 0, %s70
      %s73 = sphi 0, %s72
      %s87 = sphi 0, %s73
      %s93 = sphi 0, %s95
      %s96 = sphi 0, %s93
      %s97 = sphi 0, %s96
      %s113 = sphi 0, %s97
      %s119 = sphi 0, %s121
      %s122 = sphi 0, %s119
      %s123 = sphi 0, %s122
      %s139 = sphi 0, %s123
    $region4: #{tpu_custom_call.1} parent=1 // loop_header_branch
      %18 = sbr.rel (%p16) target = $region8
    $region5: #{tpu_custom_call.1} parent=1 // loop_body
      %s20 = ssub.s32 %s15, 1
      %s21 = ssub.s32 %s15, 2
      %s22 = sadd.s32 %s15, 1
      %s23 = ssub.s32 %s15, %s22
      %p24 = scmp.eq.s32.totalorder %s23, 0
      %s26 = sadd.s32 %s25, 1
      %s27 = scalar_select %p24, %s25, %s26
      %p30 = pneg %p24
      %p31 = scmp.eq.s32.totalorder %s15, 1
      %p32 = por %p30, %p31
      %p33 = scmp.ne.s32.totalorder %s25, %s28
      %p34 = scmp.eq.s32.totalorder %s15, 0
      %p35 = por %p33, %p34
      %p36 = scmp.ne.s32.totalorder %s25, %s28
      %p37 = scmp.eq.s32.totalorder %s20, 1
      %p38 = por %p36, %p37
      %p39 = scmp.ne.s32.totalorder %s28, %s29
      %p40 = scmp.eq.s32.totalorder %s20, 0
      %p41 = por %p39, %p40
      %p42 = scmp.ne.s32.totalorder %s28, %s29
      %p43 = scmp.eq.s32.totalorder %s21, 1
      %p44 = por %p42, %p43
      %p46 = scmp.ne.s32.totalorder %s29, %s45
      %p47 = scmp.eq.s32.totalorder %s21, 0
      %p48 = por %p46, %p47
      %s50 = sadd.s32 %s49, 1
      %p53 = scmp.eq.s32.totalorder %s15, 1
      %p54 = scmp.ne.s32.totalorder %s49, %s51
      %p55 = scmp.eq.s32.totalorder %s15, 0
      %p56 = por %p54, %p55
      %p57 = scmp.ne.s32.totalorder %s49, %s51
      %p58 = scmp.eq.s32.totalorder %s20, 1
      %p59 = por %p57, %p58
      %p60 = scmp.ne.s32.totalorder %s51, %s52
      %p61 = scmp.eq.s32.totalorder %s20, 0
      %p62 = por %p60, %p61
      %p63 = scmp.ne.s32.totalorder %s51, %s52
      %p64 = scmp.eq.s32.totalorder %s21, 1
      %p65 = por %p63, %p64
      %p67 = scmp.ne.s32.totalorder %s52, %s66
      %p68 = scmp.eq.s32.totalorder %s21, 0
      %p69 = por %p67, %p68
      %s71 = sadd.s32 %s70, 1
      %p74 = scmp.eq.s32.totalorder %s15, 1
      %p75 = scmp.ne.s32.totalorder %s70, %s72
      %p76 = scmp.eq.s32.totalorder %s15, 0
      %p77 = por %p75, %p76
      %p78 = scmp.ne.s32.totalorder %s70, %s72
      %p79 = scmp.eq.s32.totalorder %s20, 1
      %p80 = por %p78, %p79
      %p81 = scmp.ne.s32.totalorder %s72, %s73
      %p82 = scmp.eq.s32.totalorder %s20, 0
      %p83 = por %p81, %p82
      %p84 = scmp.ne.s32.totalorder %s72, %s73
      %p85 = scmp.eq.s32.totalorder %s21, 1
      %p86 = por %p84, %p85
      %p88 = scmp.ne.s32.totalorder %s73, %s87
      %p89 = scmp.eq.s32.totalorder %s21, 0
      %p90 = por %p88, %p89
      %s91 = ssub.s32 %s15, %s22
      %p92 = scmp.eq.s32.totalorder %s91, 0
      %s94 = sadd.s32 %s93, 1
      %s95 = scalar_select %p92, %s93, %s94
      %p98 = pneg %p92
      %p99 = scmp.eq.s32.totalorder %s15, 1
      %p100 = por %p98, %p99
      %p101 = scmp.ne.s32.totalorder %s93, %s96
      %p102 = scmp.eq.s32.totalorder %s15, 0
      %p103 = por %p101, %p102
      %p104 = scmp.ne.s32.totalorder %s93, %s96
      %p105 = scmp.eq.s32.totalorder %s20, 1
      %p106 = por %p104, %p105
      %p107 = scmp.ne.s32.totalorder %s96, %s97
      %p108 = scmp.eq.s32.totalorder %s20, 0
      %p109 = por %p107, %p108
      %p110 = scmp.ne.s32.totalorder %s96, %s97
      %p111 = scmp.eq.s32.totalorder %s21, 1
      %p112 = por %p110, %p111
      %p114 = scmp.ne.s32.totalorder %s97, %s113
      %p115 = scmp.eq.s32.totalorder %s21, 0
      %p116 = por %p114, %p115
      %s117 = ssub.s32 %s15, %s22
      %p118 = scmp.eq.s32.totalorder %s117, 0
      %s120 = sadd.s32 %s119, 1
      %s121 = scalar_select %p118, %s119, %s120
      %p124 = pneg %p118
      %p125 = scmp.eq.s32.totalorder %s15, 1
      %p126 = por %p124, %p125
      %p127 = scmp.ne.s32.totalorder %s119, %s122
      %p128 = scmp.eq.s32.totalorder %s15, 0
      %p129 = por %p127, %p128
      %p130 = scmp.ne.s32.totalorder %s119, %s122
      %p131 = scmp.eq.s32.totalorder %s20, 1
      %p132 = por %p130, %p131
      %p133 = scmp.ne.s32.totalorder %s122, %s123
      %p134 = scmp.eq.s32.totalorder %s20, 0
      %p135 = por %p133, %p134
      %p136 = scmp.ne.s32.totalorder %s122, %s123
      %p137 = scmp.eq.s32.totalorder %s21, 1
      %p138 = por %p136, %p137
      %p140 = scmp.ne.s32.totalorder %s123, %s139
      %p141 = scmp.eq.s32.totalorder %s21, 0
      %p142 = por %p140, %p141
      %p143 = scmp.le.s32.totalorder 1, %s15
      %p144 = scmp.lt.s32.totalorder %s15, 3
      %p145 = pnand %p143, %p144
      %p146 = pneg %p145
      // Predicated region
      $region9: #{tpu_custom_call.1} parent=5 // pred_check
        _
      $region10: #{tpu_custom_call.1} parent=5 // pred_check_branch
        %148 = sbr.rel (%p145) target = $region12
      $region11: #{tpu_custom_call.1} parent=5 // pred_region
        %s149 = ssub.s32 %s15, 1
        // Predicated region
        $region13: #{tpu_custom_call.1} parent=11 // pred_check
          %p150 = pneg %p62
        $region14: #{tpu_custom_call.1} parent=11 // pred_check_branch
          %152 = sbr.rel (%p150) target = $region16
        $region15: #{tpu_custom_call.1} parent=11 // pred_region
          %154 = vsyncadd [#allocation3], 0
          %s155 = sshll.u32 %s1, 4
          %s156 = int_to_ptr.hbm [resolvable:$true] %s155
          %s157 = sshll.u32 [#allocation2], 4
          %s158 = int_to_ptr.vmem [resolvable:$true] %s157
          %163 = dma.hbm_to_vmem [thread:$0]  %s156, 1024, %s158, [#allocation3], 128, 128, 8
        $region16: #{tpu_custom_call.1} parent=11 // pred_fallthru
          _
        // Predicated region
        $region17: #{tpu_custom_call.1} parent=11 // pred_check
          %p164 = pneg %p83
        $region18: #{tpu_custom_call.1} parent=11 // pred_check_branch
          %166 = sbr.rel (%p164) target = $region20
        $region19: #{tpu_custom_call.1} parent=11 // pred_region
          %168 = vsyncadd [#allocation6], 0
          %s169 = sshll.u32 %s2, 4
          %s170 = int_to_ptr.hbm [resolvable:$true] %s169
          %s171 = sshll.u32 [#allocation5], 4
          %s172 = int_to_ptr.vmem [resolvable:$true] %s171
          %177 = dma.hbm_to_vmem [thread:$0]  %s170, 32, %s172, [#allocation6], 16, 16, 1
        $region20: #{tpu_custom_call.1} parent=11 // pred_fallthru
          _
      $region12: #{tpu_custom_call.1} parent=5 // pred_fallthru
        _
      %p178 = scmp.lt.s32.totalorder %s15, 2
      // Predicated region
      $region21: #{tpu_custom_call.1} parent=5 // pred_check
        %p179 = pneg %p178
      $region22: #{tpu_custom_call.1} parent=5 // pred_check_branch
        %181 = sbr.rel (%p179) target = $region24
      $region23: #{tpu_custom_call.1} parent=5 // pred_region
        // Predicated region
        $region25: #{tpu_custom_call.1} parent=23 // pred_check
          %p182 = pneg %p35
        $region26: #{tpu_custom_call.1} parent=23 // pred_check_branch
          %184 = sbr.rel (%p182) target = $region28
        $region27: #{tpu_custom_call.1} parent=23 // pred_region
          %p185 = scmp.lt.s32.totalorder %s15, 1
          %s186 = scalar_select %p185, %s15, 1
          %s187 = smul.addr %s186, 8
          %s188 = scalar_lea.vmem %s0, %s187
        $region28: #{tpu_custom_call.1} parent=23 // pred_fallthru
          _
        // Predicated region
        $region29: #{tpu_custom_call.1} parent=23 // pred_check
          %p189 = pneg %p103
        $region30: #{tpu_custom_call.1} parent=23 // pred_check_branch
          %191 = sbr.rel (%p189) target = $region32
        $region31: #{tpu_custom_call.1} parent=23 // pred_region
          %p192 = scmp.lt.s32.totalorder %s15, 1
          %s193 = scalar_select %p192, %s15, 1
          %s194 = smul.addr %s193, 8
          %s195 = scalar_lea.vmem %s3, %s194
        $region32: #{tpu_custom_call.1} parent=23 // pred_fallthru
          _
      $region24: #{tpu_custom_call.1} parent=5 // pred_fallthru
        _
      %p196 = scmp.le.s32.totalorder 1, %s15
      %p197 = scmp.lt.s32.totalorder %s15, 3
      %p198 = pnand %p196, %p197
      %p199 = pneg %p198
      // Predicated region
      $region33: #{tpu_custom_call.1} parent=5 // pred_check
        _
      $region34: #{tpu_custom_call.1} parent=5 // pred_check_branch
        %201 = sbr.rel (%p198) target = $region36
      $region35: #{tpu_custom_call.1} parent=5 // pred_region
        %s202 = ssub.s32 %s15, 1
        // Predicated region
        $region37: #{tpu_custom_call.1} parent=35 // pred_check
          %p203 = pneg %p62
        $region38: #{tpu_custom_call.1} parent=35 // pred_check_branch
          %205 = sbr.rel (%p203) target = $region40
        $region39: #{tpu_custom_call.1} parent=35 // pred_region
          %207 = dma.done [#allocation3], 1024
        $region40: #{tpu_custom_call.1} parent=35 // pred_fallthru
          _
        // Predicated region
        $region41: #{tpu_custom_call.1} parent=35 // pred_check
          %p208 = pneg %p83
        $region42: #{tpu_custom_call.1} parent=35 // pred_check_branch
          %210 = sbr.rel (%p208) target = $region44
        $region43: #{tpu_custom_call.1} parent=35 // pred_region
          %212 = dma.done [#allocation6], 32
        $region44: #{tpu_custom_call.1} parent=35 // pred_fallthru
          _
        %p213 = scmp.lt.s32.totalorder %s20, 1
        %s214 = scalar_select %p213, %s20, 1
        %s215 = smul.addr %s214, 8
        %s216 = scalar_lea.vmem %s0, %s215
        %p217 = pneg %p41
        %p218 = pneg %p38
        %p219 = pneg %p62
        %p220 = pneg %p59
        %p221 = pneg %p83
        %p222 = pneg %p80
        %p223 = scmp.lt.s32.totalorder %s20, 1
        %s224 = scalar_select %p223, %s20, 1
        %s225 = smul.addr %s224, 8
        %s226 = scalar_lea.vmem %s3, %s225
        %p227 = pneg %p109
        %p228 = pneg %p106
        %p229 = pneg %p135
        %p230 = pneg %p132
        %s231 = sand.u32 %s122, 1
        %s232 = scalar_lea.sflag [#allocation4], %s231
        %s233 = sand.u32 %s122, 1
        %s234 = smul.addr %s233, 8
        %s235 = scalar_lea.vmem [#allocation7], %s234
        %p236 = scmp.lt.s32.totalorder %s20, 1
        %s237 = scalar_select %p236, %s20, 1
        %s238 = smul.addr %s237, 8
        %s239 = scalar_lea.vmem %s0, %s238
        %p240 = scmp.lt.s32.totalorder %s20, 1
        %s241 = scalar_select %p240, %s20, 1
        %s242 = smul.addr %s241, 8
        %s243 = scalar_lea.vmem %s3, %s242
        %v244 = vld [vmem:[%s243] sm:$0xff]
        %246 = vset.pattern.permute.xlu0 0
        %247 = vperm.xlu0 %246, %v244
        %v248 = vpop.permute.xlu0 %247
        %v250 = vld [vmem:[%s239] sm:$0xff]
        %v251 = vld [vmem:[#allocation2] sm:$0xff]
        %v252 = vld [vmem:[#allocation2 + $0x8] sm:$0xff]
        %v253 = vld [vmem:[#allocation2 + $0x10] sm:$0xff]
        %v254 = vld [vmem:[#allocation2 + $0x18] sm:$0xff]
        %v255 = vld [vmem:[#allocation5] sm:$0x1]
        %v257 = vperm.slane %v255, 0
        %vm259 = vcmask 261120
        %v261 = vsel %vm259, %v250, 0
        %263 = vmatpush.msra.mxu0 0.0
        %264 = vmatpush.msra.mxu0 0.0
        %265 = vmatpush.msra.mxu0 0.0
        %266 = vmatpush.msra.mxu0 0.0
        %267 = vmatpush.msra.mxu0 0.0
        %268 = vmatpush.msra.mxu0 0.0
        %269 = vmatpush.msra.mxu0 0.0
        %270 = vmatpush.msra.mxu0 0.0
        %271 = vmatpush.msra.mxu0 0.0
        %272 = vmatpush.msra.mxu0 0.0
        %273 = vmatpush.msra.mxu0 0.0
        %274 = vmatpush.msra.mxu0 0.0
        %275 = vmatpush.msra.mxu0 %v254
        %276 = vmatpush.msra.mxu0 %v253
        %277 = vmatpush.msra.mxu0 %v252
        %278 = vmatpush.msra.mxu0 %v251
        %279 = vmatmul.f32.gmra.mxu0 %v261
        %v280 = vpop.f32.mrf.mxu0
        %v281 = vadd.f32 %v257, %v280
        %282 = vdwg.mxu0
        %v283 = vmul.f32 %v281, %v281
        %v284 = vmul.f32 %v281, %v283
        %v285 = vmul.f32 %v284, 0.044715
        %v286 = vadd.f32 %v281, %v285
        %v287 = vmul.f32 %v286, 0.7978846
        %v288 = vtanh.pop %v287
        %v289 = vadd.f32 %v288, 1.0
        %v290 = vmul.f32 %v289, 0.5
        %v291 = vmul.f32 %v281, %v290
        %v292 = vmul.f32 %v291, %v248
        %s293 = scalar_lea.vmem [#allocation2], 32
        %v294 = vld [vmem:[%s293] sm:$0xff]
        %v295 = vld [vmem:[%s293 + $0x8] sm:$0xff]
        %v296 = vld [vmem:[%s293 + $0x10] sm:$0xff]
        %v297 = vld [vmem:[%s293 + $0x18] sm:$0xff]
        %s298 = scalar_lea.vmem [#allocation5], 1
        %v299 = vld [vmem:[%s298] sm:$0x1]
        %v301 = vperm.slane %v299, 0
        %v304 = vsel %vm259, %v292, 0
        %306 = vmatpush.msra.mxu0 0.0
        %307 = vmatpush.msra.mxu0 0.0
        %308 = vmatpush.msra.mxu0 0.0
        %309 = vmatpush.msra.mxu0 0.0
        %310 = vmatpush.msra.mxu0 0.0
        %311 = vmatpush.msra.mxu0 0.0
        %312 = vmatpush.msra.mxu0 0.0
        %313 = vmatpush.msra.mxu0 0.0
        %314 = vmatpush.msra.mxu0 0.0
        %315 = vmatpush.msra.mxu0 0.0
        %316 = vmatpush.msra.mxu0 0.0
        %317 = vmatpush.msra.mxu0 0.0
        %318 = vmatpush.msra.mxu0 %v297
        %319 = vmatpush.msra.mxu0 %v296
        %320 = vmatpush.msra.mxu0 %v295
        %321 = vmatpush.msra.mxu0 %v294
        %322 = vmatmul.f32.gmra.mxu0 %v304
        %v323 = vpop.f32.mrf.mxu0
        %v324 = vadd.f32 %v301, %v323
        %325 = vdwg.mxu0
        %v326 = vmul.f32 %v324, %v324
        %v327 = vmul.f32 %v324, %v326
        %v328 = vmul.f32 %v327, 0.044715
        %v329 = vadd.f32 %v324, %v328
        %v330 = vmul.f32 %v329, 0.7978846
        %v331 = vtanh.pop %v330
        %v332 = vadd.f32 %v331, 1.0
        %v333 = vmul.f32 %v332, 0.5
        %v334 = vmul.f32 %v324, %v333
        %v335 = vmul.f32 %v334, %v248
        %336 = vst.msk [vmem:[%s235] sm:$0xff] %vm259, %v335
        %s337 = sand.u32 %s122, 1
        %s338 = scalar_lea.sflag [#allocation4], %s337
        %s339 = sand.u32 %s122, 1
        %s340 = smul.addr %s339, 8
        %s341 = scalar_lea.vmem [#allocation7], %s340
        // Predicated region
        $region45: #{tpu_custom_call.1} parent=35 // pred_check
          %p342 = pneg %p132
        $region46: #{tpu_custom_call.1} parent=35 // pred_check_branch
          %344 = sbr.rel (%p342) target = $region48
        $region47: #{tpu_custom_call.1} parent=35 // pred_region
          %346 = vsyncadd %s338, 0
          %s347 = smul.addr %s20, 8
          %s348 = scalar_lea.hbm %s4, %s347
          %s350 = sshll.u32 %s341, 4
          %s351 = int_to_ptr.vmem [resolvable:$true] %s350
          %s352 = sshll.u32 %s348, 4
          %s353 = int_to_ptr.hbm [resolvable:$true] %s352
          %355 = dma.vmem_to_hbm [thread:$0]  %s351, 128, %s353, %s338
        $region48: #{tpu_custom_call.1} parent=35 // pred_fallthru
          _
      $region36: #{tpu_custom_call.1} parent=5 // pred_fallthru
        _
      %p356 = scmp.le.s32.totalorder 2, %s15
      // Predicated region
      $region49: #{tpu_custom_call.1} parent=5 // pred_check
        %p357 = pneg %p356
      $region50: #{tpu_custom_call.1} parent=5 // pred_check_branch
        %359 = sbr.rel (%p357) target = $region52
      $region51: #{tpu_custom_call.1} parent=5 // pred_region
        %s360 = ssub.s32 %s15, 2
        // Predicated region
        $region53: #{tpu_custom_call.1} parent=51 // pred_check
          %p361 = pneg %p138
        $region54: #{tpu_custom_call.1} parent=51 // pred_check_branch
          %363 = sbr.rel (%p361) target = $region56
        $region55: #{tpu_custom_call.1} parent=51 // pred_region
          %s364 = sand.u32 %s123, 1
          %s365 = scalar_lea.sflag [#allocation4], %s364
          %s366 = sand.u32 %s123, 1
          %s367 = smul.addr %s366, 8
          %s368 = scalar_lea.vmem [#allocation7], %s367
          %370 = dma.done %s365, 128
        $region56: #{tpu_custom_call.1} parent=51 // pred_fallthru
          _
      $region52: #{tpu_custom_call.1} parent=5 // pred_fallthru
        _
    $region6: #{tpu_custom_call.1} parent=1 // loop_footer
      %s19 = sadd.s32 1, %s15
    $region7: #{tpu_custom_call.1} parent=1 // loop_footer_branch
      %14 = sbr.rel target = $region3
    $region8: #{tpu_custom_call.1} parent=1 // loop_exit
      _
    %371 = vsyncpa [#allocation3], 1
    %s372 = scalar_lea.sflag [#allocation3], 1
    %373 = vsyncpa %s372, 1
    %374 = vsyncpa [#allocation6], 1
    %375 = vsyncpa [#allocation4], 1
    %s376 = scalar_lea.sflag [#allocation4], 1
    %377 = vsyncpa %s376, 1

</llo_original>
